<compile_context>
chip_gen: v7x
topology: tpu7x:2x2x1
jax: 0.10.0
libtpu: 0.0.40
codegen_flags: <defaults>
</compile_context>

<pallas_src>
import jax
import jax.numpy as jnp
from jax.experimental import pallas as pl
from jax.experimental.pallas import tpu as pltpu


def _implicit_m_kernel(x_ref, s_ref, o_ref):
    # x_ref: (TR, TL)  rows = (batch, channel) pairs, lanes = flattened spatial
    # s_ref: (TR, 1)   per-row implicit multiplier (lane-broadcast by the VPU)
    # o_ref: (TR, TL)
    o_ref[...] = x_ref[...] * s_ref[...]


def _round_up(x, m):
    return ((x + m - 1) // m) * m


def implicit_m_forward(x_nchw, implicit, *, force_pallas=False):
    """y = implicit * x.  implicit: (1, C, 1, 1), x: (B, C, H, W)."""
    B, C, H, W = x_nchw.shape
    HW = H * W
    R = B * C

    # PyTorch type promotion: (f32 param) * (half x) computes/returns f32.
    out_dtype = jnp.result_type(x_nchw.dtype, implicit.dtype)
    itemsize = jnp.dtype(out_dtype).itemsize

    # Tiny inputs: launch + per-step overhead dominates a pure bandwidth op and
    # XLA will fuse the multiply into neighbors for free.
    if not force_pallas and R * HW * itemsize < (256 * 1024):
        return (implicit.astype(out_dtype) * x_nchw.astype(out_dtype))

    # --- layout: free NCHW reshape; rows = (b, c), lanes = spatial -------------
    x2 = x_nchw.astype(out_dtype).reshape(R, HW)
    scale = jnp.broadcast_to(
        implicit.reshape(1, C).astype(out_dtype), (B, C)).reshape(R, 1)

    # --- tiling ----------------------------------------------------------------
    # Sublane quantum is dtype-aware (sub-32-bit dtypes pack along sublanes).
    row_q = {4: 8, 2: 16, 1: 32}.get(itemsize, 8)

    # Lane tile: multiple of 128, capped at 4096 so huge H*W still fits VMEM and
    # output stores stay lane-dense (unmasked vst).
    tl = min(_round_up(HW, 128), 4096)
    HW_pad = _round_up(HW, tl)

    # Row tile: target ~1 MiB per x block; double-buffered (in + out + scale)
    # residency is then ~4 MiB, comfortably under every default scoped-VMEM limit.
    block_budget = 1 << 20  # bytes per x block
    tr = max(row_q, (block_budget // (tl * itemsize)) // row_q * row_q)
    tr = min(tr, _round_up(R, row_q))

    # v7x megacore: guarantee >= 2 parallel grid steps when the row count allows.
    if _round_up(R, tr) // tr == 1 and HW_pad // tl == 1 and R > row_q:
        tr = max(row_q, _round_up((R + 1) // 2, row_q))

    R_pad = _round_up(R, tr)

    # --- padding (only when needed) ---------------------------------------------
    if (R_pad, HW_pad) != (R, HW):
        x2 = jnp.pad(x2, ((0, R_pad - R), (0, HW_pad - HW)))
        scale = jnp.pad(scale, ((0, R_pad - R), (0, 0)))

    grid = (R_pad // tr, HW_pad // tl)

    cost = pl.CostEstimate(
        flops=R * HW,
        transcendentals=0,
        bytes_accessed=2 * R * HW * itemsize + R * itemsize,
    )

    out = pl.pallas_call(
        _implicit_m_kernel,
        out_shape=jax.ShapeDtypeStruct((R_pad, HW_pad), out_dtype),
        grid_spec=pltpu.PrefetchScalarGridSpec(
            num_scalar_prefetch=0,
            grid=grid,
            in_specs=[
                pl.BlockSpec((tr, tl), lambda i, j: (i, j)),
                pl.BlockSpec((tr, 1), lambda i, j: (i, 0)),
            ],
            out_specs=pl.BlockSpec((tr, tl), lambda i, j: (i, j)),
        ),
        compiler_params=pltpu.CompilerParams(
            dimension_semantics=("parallel", "parallel")),
        cost_estimate=cost,
    )(x2, scale)

    if (R_pad, HW_pad) != (R, HW):
        out = out[:R, :HW]
    return out.reshape(B, C, H, W)


def _reference(x_nchw, implicit):
    return implicit * x_nchw


if __name__ == "__main__":
    # ImplicitM(channel=4) applied to a (2, 4, 16, 16) feature map.
    B, C, H, W = 2, 4, 16, 16

    key = jax.random.PRNGKey(0)
    k1, k2 = jax.random.split(key, 2)

    x = jax.random.normal(k1, (B, C, H, W), dtype=jnp.float32)
    # nn.init.normal_(implicit, mean=1.0, std=0.02)
    implicit = 1.0 + 0.02 * jax.random.normal(k2, (1, C, 1, 1), dtype=jnp.float32)

    # force_pallas so the test-size input actually exercises the kernel
    # (production callers would leave it False and let tiny inputs fuse in XLA).
    y = implicit_m_forward(x, implicit, force_pallas=True)
    y = jax.block_until_ready(y)

    y_ref = _reference(x, implicit)
    assert y.shape == (B, C, H, W)
    assert y.dtype == y_ref.dtype
    assert jnp.allclose(y, y_ref, atol=1e-6, rtol=1e-6), "mismatch vs reference"

    print("KERNEL_OK")
</pallas_src>

<mosaic_0001>
module attributes {stable_mosaic.version = 11 : i64} {
  func.func @_implicit_m_kernel(%arg0: i32, %arg1: i32, %arg2: memref<8x256xf32, #tpu.memory_space<vmem>>, %arg3: memref<8x1xf32, #tpu.memory_space<vmem>>, %arg4: memref<8x256xf32, #tpu.memory_space<vmem>>) attributes {dimension_semantics = [#tpu.dimension_semantics<parallel>, #tpu.dimension_semantics<parallel>], iteration_bounds = array<i64: 1, 1>, scalar_prefetch = 0 : i64, scratch_operands = 0 : i64, tpu.core_type = #tpu.core_type<tc>, window_params = [{transform_indices = @transform_0, window_bounds = array<i64: 8, 256>}, {transform_indices = @transform_1, window_bounds = array<i64: 8, 1>}, {transform_indices = @transform_2, window_bounds = array<i64: 8, 256>}]} {
    %c0 = arith.constant 0 : index
    %c0_0 = arith.constant 0 : index
    %0 = vector.load %arg2[%c0, %c0_0] : memref<8x256xf32, #tpu.memory_space<vmem>>, vector<8x256xf32>
    %c0_1 = arith.constant 0 : index
    %c0_2 = arith.constant 0 : index
    %1 = vector.load %arg3[%c0_1, %c0_2] : memref<8x1xf32, #tpu.memory_space<vmem>>, vector<8x1xf32>
    %2 = vector.broadcast %1 : vector<8x1xf32> to vector<8x256xf32>
    %3 = arith.mulf %0, %2 : vector<8x256xf32>
    %c0_3 = arith.constant 0 : index
    %c0_4 = arith.constant 0 : index
    %4 = vector.load %arg4[%c0_3, %c0_4] : memref<8x256xf32, #tpu.memory_space<vmem>>, vector<8x256xf32>
    tpu.vector_store %arg4[%c0_3, %c0_4], %3 {strides = array<i32>} : memref<8x256xf32, #tpu.memory_space<vmem>>, vector<8x256xf32>,
    return
  }
  func.func @transform_0(%arg0: i32, %arg1: i32) -> (i32, i32) {
    %c0_i32 = arith.constant 0 : i32
    return %arg0, %arg1 : i32, i32
  }
  func.func @transform_1(%arg0: i32, %arg1: i32) -> (i32, i32) {
    %c0_i32 = arith.constant 0 : i32
    %c0_i32_0 = arith.constant 0 : i32
    return %arg0, %c0_i32 : i32, i32
  }
  func.func @transform_2(%arg0: i32, %arg1: i32) -> (i32, i32) {
    %c0_i32 = arith.constant 0 : i32
    return %arg0, %arg1 : i32, i32
  }
}

</mosaic_0001>

<llo_original>
// kernel: tpu_custom_call.1
$region0: #{tpu_custom_call.1}
  #allocation0 [shape = 'u32[]', space=smem, size = 0x4, offset = 0x4, fixed_abs, tag = 'smem constant byte address 0x4 - core index']
  #allocation1 [shape = 'u32[144,128]{1,0:T(1,128)}', space=vmem, size = 0x12000, scoped, tag = 'internal scratch']
  %s0 = inlined_call_operand.hbm [shape: f32[8,256], index: 0, kind: input, shape index: {}]
  %s1 = inlined_call_operand.vmem [shape: f32[8,1], index: 1, kind: input, shape index: {}]
  %s2 = inlined_call_operand.hbm [shape: f32[8,256], index: 2, kind: output, shape index: {}]
  %s3 = sld [smem:[#allocation0]]
  $region22: #{tpu_custom_call.1} parent=0
    _
  %s5 = ssub.s32 1, %s3
  %s6 = scalar_select 0, %s5, %s3
  $region1: #{tpu_custom_call.1} parent=0
    #allocation2 [shape = 'u8[8192]{0}', space=vmem, size = 0x2000, scoped, tag = 'input window, operand 0, single buffered']
    #allocation3 [shape = 's32[1]{0}', space=sflag, size = 0x4, scoped, tag = 'scoped memory for tpu_custom_call.1']
    #allocation4 [shape = 's32[1]{0}', space=sflag, size = 0x4, scoped, tag = 'scoped memory for tpu_custom_call.1']
    #allocation5 [shape = 'u8[8192]{0}', space=vmem, size = 0x2000, scoped, tag = 'output window, operand 0, single buffered']
    %7 = vsyncpa [#allocation3], 0
    %8 = vsyncpa [#allocation4], 0
    // Predicated region
    $region2: #{tpu_custom_call.1} parent=1 // pred_check
      _
    $region3: #{tpu_custom_call.1} parent=1 // pred_check_branch
      %10 = sbr.rel (0) target = $region5
    $region4: #{tpu_custom_call.1} parent=1 // pred_region
      %s12 = ssub.s32 256, 256
      %13 = vsyncadd [#allocation3], %s12
      %s15 = sshll.u32 [#allocation2], 4
      %s16 = int_to_ptr.vmem [resolvable:$true] %s15
      %18 = dma.hbm_to_vmem [thread:$0]  %s0, 256, %s16, [#allocation3]
    $region5: #{tpu_custom_call.1} parent=1 // pred_fallthru
      _
    // Predicated region
    $region6: #{tpu_custom_call.1} parent=1 // pred_check
      _
    $region7: #{tpu_custom_call.1} parent=1 // pred_check_branch
      %20 = sbr.rel (0) target = $region9
    $region8: #{tpu_custom_call.1} parent=1 // pred_region
      _
    $region9: #{tpu_custom_call.1} parent=1 // pred_fallthru
      _
    // Predicated region
    $region10: #{tpu_custom_call.1} parent=1 // pred_check
      _
    $region11: #{tpu_custom_call.1} parent=1 // pred_check_branch
      %22 = sbr.rel (0) target = $region13
    $region12: #{tpu_custom_call.1} parent=1 // pred_region
      %23 = dma.done [#allocation3], 256
    $region13: #{tpu_custom_call.1} parent=1 // pred_fallthru
      _
    %v24 = vld [vmem:[#allocation2] sm:$0xff]
    %v25 = vld [vmem:[#allocation2 + $0x8] sm:$0xff]
    %v26 = vld [vmem:[%s1] sm:$0xff]
    %28 = vset.pattern.permute.xlu0 0
    %29 = vperm.xlu0 %28, %v26
    %v30 = vpop.permute.xlu0 %29
    %v32 = vmul.f32 %v24, %v30
    %v33 = vmul.f32 %v25, %v30
    %34 = vst [vmem:[#allocation5] sm:$0xff] %v32
    %35 = vst [vmem:[#allocation5 + $0x8] sm:$0xff] %v33
    // Predicated region
    $region14: #{tpu_custom_call.1} parent=1 // pred_check
      _
    $region15: #{tpu_custom_call.1} parent=1 // pred_check_branch
      %37 = sbr.rel (0) target = $region17
    $region16: #{tpu_custom_call.1} parent=1 // pred_region
      %s39 = ssub.s32 256, 256
      %40 = vsyncadd [#allocation4], %s39
      %s42 = sshll.u32 [#allocation5], 4
      %s43 = int_to_ptr.vmem [resolvable:$true] %s42
      %45 = dma.vmem_to_hbm [thread:$0]  %s43, 256, %s2, [#allocation4]
    $region17: #{tpu_custom_call.1} parent=1 // pred_fallthru
      _
    // Predicated region
    $region18: #{tpu_custom_call.1} parent=1 // pred_check
      _
    $region19: #{tpu_custom_call.1} parent=1 // pred_check_branch
      %47 = sbr.rel (0) target = $region21
    $region20: #{tpu_custom_call.1} parent=1 // pred_region
      %48 = dma.done [#allocation4], 256
    $region21: #{tpu_custom_call.1} parent=1 // pred_fallthru
      _
    %49 = vsyncpa [#allocation3], 1
    %50 = vsyncpa [#allocation4], 1

</llo_original>
